<compile_context>
chip_gen: v7x
topology: tpu7x:2x2x1
jax: 0.10.0
libtpu: 0.0.40
codegen_flags: <defaults>
</compile_context>

<pallas_src>
import math

import jax
import jax.numpy as jnp
from jax.experimental import pallas as pl
from jax.experimental.pallas import tpu as pltpu

# GELU(x) = 0.5*x*(1 + tanh(sqrt(2/pi)*(x + 0.044715*x^3)))
#         = x * sigmoid(2*sqrt(2/pi)*(x + 0.044715*x^3))
#         = x * sigmoid(x * (K1 + K2*x^2))
_K1 = 2.0 * math.sqrt(2.0 / math.pi)
_K2 = 2.0 * math.sqrt(2.0 / math.pi) * 0.044715

_LANE_CANDIDATES = (2048, 1024, 512, 256, 128)  # lane-dense last dims
_TILE_BYTES = 4 * 1024 * 1024                   # ~4 MiB of input per grid step


def _gelu_kernel(x_ref, o_ref):
    x = x_ref[...].astype(jnp.float32)
    inner = x * (jnp.float32(_K1) + jnp.float32(_K2) * (x * x))
    y = x * jax.nn.sigmoid(inner)
    o_ref[...] = y.astype(o_ref.dtype)


def gelu_tanh(hidden: jax.Array) -> jax.Array:
    """Elementwise GELU matching torch.nn.GELU(approximate='tanh')."""
    orig_shape = hidden.shape
    orig_dtype = hidden.dtype
    n = hidden.size
    if n == 0:
        return hidden

    # ---- pick a lane-dense layout that avoids padding when possible ----
    lanes = None
    for cand in _LANE_CANDIDATES:
        if n % cand == 0:
            lanes = cand
            break

    flat = hidden.reshape(-1)
    padded = False
    if lanes is None:
        # Rare fallback: pad (once) to the next multiple of 128 lanes.
        lanes = 128
        rows = pl.cdiv(n, lanes)
        flat = jnp.pad(flat, (0, rows * lanes - n))
        padded = True
    else:
        rows = n // lanes
    x2d = flat.reshape(rows, lanes)

    # ---- tile rows from a byte budget (dtype-aware), partial last block OK ----
    itemsize = jnp.dtype(orig_dtype).itemsize
    tile_rows = max(32, _TILE_BYTES // (lanes * itemsize))  # multiple of 32
    if rows <= tile_rows:
        tile_rows = rows  # single full-extent block (exempt from (8,128) rule)
    grid = (pl.cdiv(rows, tile_rows),)

    out2d = pl.pallas_call(
        _gelu_kernel,
        out_shape=jax.ShapeDtypeStruct((rows, lanes), orig_dtype),
        grid=grid,
        in_specs=[pl.BlockSpec((tile_rows, lanes), lambda i: (i, 0))],
        out_specs=pl.BlockSpec((tile_rows, lanes), lambda i: (i, 0)),
        compiler_params=pltpu.CompilerParams(
            # Row-tile axis is embarrassingly parallel -> megacore sharding.
            dimension_semantics=("parallel",),
            # ~16-17 MiB actually used (4 MiB tile x in/out x double-buffer);
            # 48 MiB limit keeps headroom yet fits v7x's 64 MiB VMEM.
            vmem_limit_bytes=48 * 1024 * 1024,
        ),
    )(x2d)

    out = out2d.reshape(-1)
    if padded:
        out = out[:n]
    return out.reshape(orig_shape)


if __name__ == "__main__":
    key = jax.random.PRNGKey(0)

    # Primary case: BERT-style hidden states (batch=2, seq=8, hidden=32).
    x = jax.random.normal(key, (2, 8, 32), dtype=jnp.float32)
    y = jax.block_until_ready(gelu_tanh(x))
    y_ref = jax.nn.gelu(x, approximate=True)
    assert y.shape == x.shape and y.dtype == x.dtype
    assert jnp.allclose(y, y_ref, atol=1e-5, rtol=1e-5), "mismatch vs reference (primary)"

    # Fallback path: size not divisible by 128 -> single pad + final slice.
    x2 = jax.random.normal(jax.random.PRNGKey(1), (3, 7, 33), dtype=jnp.float32)
    y2 = jax.block_until_ready(gelu_tanh(x2))
    assert jnp.allclose(y2, jax.nn.gelu(x2, approximate=True), atol=1e-5, rtol=1e-5), \
        "mismatch vs reference (pad fallback)"

    # Multi-block path with a partial last row-block (no wrapper padding).
    x3 = jax.random.normal(jax.random.PRNGKey(2), (5000, 256), dtype=jnp.float32)
    y3 = jax.block_until_ready(gelu_tanh(x3))
    assert jnp.allclose(y3, jax.nn.gelu(x3, approximate=True), atol=1e-5, rtol=1e-5), \
        "mismatch vs reference (multi-block)"

    print("KERNEL_OK")
</pallas_src>

<mosaic_0001>
module attributes {stable_mosaic.version = 11 : i64} {
  func.func @_gelu_kernel(%arg0: i32, %arg1: memref<1x512xf32, #tpu.memory_space<vmem>>, %arg2: memref<1x512xf32, #tpu.memory_space<vmem>>) attributes {dimension_semantics = [#tpu.dimension_semantics<parallel>], iteration_bounds = array<i64: 1>, scalar_prefetch = 0 : i64, scratch_operands = 0 : i64, tpu.core_type = #tpu.core_type<tc>, window_params = [{transform_indices = @transform_0, window_bounds = array<i64: 1, 512>}, {transform_indices = @transform_1, window_bounds = array<i64: 1, 512>}]} {
    %c0 = arith.constant 0 : index
    %c0_0 = arith.constant 0 : index
    %0 = vector.load %arg1[%c0, %c0_0] : memref<1x512xf32, #tpu.memory_space<vmem>>, vector<1x512xf32>
    %1 = arith.mulf %0, %0 : vector<1x512xf32>
    %cst = arith.constant 0.0713548139 : f32
    %2 = vector.broadcast %cst : f32 to vector<1x512xf32>
    %3 = arith.mulf %2, %1 : vector<1x512xf32>
    %cst_1 = arith.constant 1.59576917 : f32
    %4 = vector.broadcast %cst_1 : f32 to vector<1x512xf32>
    %5 = arith.addf %4, %3 : vector<1x512xf32>
    %6 = arith.mulf %0, %5 : vector<1x512xf32>
    %7 = arith.negf %6 : vector<1x512xf32>
    %8 = math.exp %7 : vector<1x512xf32>
    %cst_2 = arith.constant 1.000000e+00 : f32
    %9 = vector.broadcast %cst_2 : f32 to vector<1x512xf32>
    %10 = arith.addf %9, %8 : vector<1x512xf32>
    %11 = arith.divf %9, %10 : vector<1x512xf32>
    %12 = arith.mulf %0, %11 : vector<1x512xf32>
    %c0_3 = arith.constant 0 : index
    %c0_4 = arith.constant 0 : index
    %13 = vector.load %arg2[%c0_3, %c0_4] : memref<1x512xf32, #tpu.memory_space<vmem>>, vector<1x512xf32>
    tpu.vector_store %arg2[%c0_3, %c0_4], %12 {strides = array<i32>} : memref<1x512xf32, #tpu.memory_space<vmem>>, vector<1x512xf32>,
    return
  }
  func.func @transform_0(%arg0: i32) -> (i32, i32) {
    %c0_i32 = arith.constant 0 : i32
    %c0_i32_0 = arith.constant 0 : i32
    return %arg0, %c0_i32 : i32, i32
  }
  func.func @transform_1(%arg0: i32) -> (i32, i32) {
    %c0_i32 = arith.constant 0 : i32
    %c0_i32_0 = arith.constant 0 : i32
    return %arg0, %c0_i32 : i32, i32
  }
}

</mosaic_0001>

<llo_original>
// kernel: tpu_custom_call.1
$region0: #{tpu_custom_call.1}
  #allocation0 [shape = 'u32[]', space=smem, size = 0x4, offset = 0x4, fixed_abs, tag = 'smem constant byte address 0x4 - core index']
  #allocation1 [shape = 'u32[144,128]{1,0:T(1,128)}', space=vmem, size = 0x12000, scoped, tag = 'internal scratch']
  %s0 = inlined_call_operand.hbm [shape: f32[1,512], index: 0, kind: input, shape index: {}]
  %s1 = inlined_call_operand.hbm [shape: f32[1,512], index: 1, kind: output, shape index: {}]
  %s2 = sld [smem:[#allocation0]]
  $region18: #{tpu_custom_call.1} parent=0
    _
  %s4 = ssub.s32 1, %s2
  %s5 = scalar_select 0, %s4, %s2
  $region1: #{tpu_custom_call.1} parent=0
    #allocation2 [shape = 'u8[2048]{0}', space=vmem, size = 0x800, scoped, tag = 'input window, operand 0, single buffered']
    #allocation3 [shape = 's32[1]{0}', space=sflag, size = 0x4, scoped, tag = 'scoped memory for tpu_custom_call.1']
    #allocation4 [shape = 's32[1]{0}', space=sflag, size = 0x4, scoped, tag = 'scoped memory for tpu_custom_call.1']
    #allocation5 [shape = 'u8[2048]{0}', space=vmem, size = 0x800, scoped, tag = 'output window, operand 0, single buffered']
    %6 = vsyncpa [#allocation3], 0
    %7 = vsyncpa [#allocation4], 0
    // Predicated region
    $region2: #{tpu_custom_call.1} parent=1 // pred_check
      _
    $region3: #{tpu_custom_call.1} parent=1 // pred_check_branch
      %9 = sbr.rel (0) target = $region5
    $region4: #{tpu_custom_call.1} parent=1 // pred_region
      %s11 = ssub.s32 64, 64
      %12 = vsyncadd [#allocation3], %s11
      %s14 = sshll.u32 [#allocation2], 4
      %s15 = int_to_ptr.vmem [resolvable:$true] %s14
      %17 = dma.hbm_to_vmem [thread:$0]  %s0, 64, %s15, [#allocation3]
    $region5: #{tpu_custom_call.1} parent=1 // pred_fallthru
      _
    // Predicated region
    $region6: #{tpu_custom_call.1} parent=1 // pred_check
      _
    $region7: #{tpu_custom_call.1} parent=1 // pred_check_branch
      %19 = sbr.rel (0) target = $region9
    $region8: #{tpu_custom_call.1} parent=1 // pred_region
      %20 = dma.done [#allocation3], 64
    $region9: #{tpu_custom_call.1} parent=1 // pred_fallthru
      _
    %v21 = vld [vmem:[#allocation2] sm:$0xf]
    %v22 = vmul.f32 %v21, %v21
    %v23 = vmul.f32 %v22, 0.071354814
    %v24 = vadd.f32 %v23, 1.5957692
    %v25 = vmul.f32 %v21, %v24
    %v26 = vxor.u32 %v25, 2147483648
    %v27 = vmul.f32 %v26, 1.442695
    %v28 = vpow.pop %v27
    %v29 = vadd.f32 %v28, 1.0
    %v30 = vrcp.pop %v29
    %v31 = vmul.f32 1.0, %v30
    %v32 = vmul.f32 %v21, %v31
    %v33 = vlaneseq
    %vm34 = vcmp.ge.s32.totalorder %v33, 0
    %vm35 = vcmp.lt.s32.totalorder %v33, 512
    %vm36 = vmand %vm34, %vm35
    %37 = vst.msk [vmem:[#allocation5] sm:$0xf] %vm36, %v32
    // Predicated region
    $region10: #{tpu_custom_call.1} parent=1 // pred_check
      _
    $region11: #{tpu_custom_call.1} parent=1 // pred_check_branch
      %39 = sbr.rel (0) target = $region13
    $region12: #{tpu_custom_call.1} parent=1 // pred_region
      %s41 = ssub.s32 64, 64
      %42 = vsyncadd [#allocation4], %s41
      %s44 = sshll.u32 [#allocation5], 4
      %s45 = int_to_ptr.vmem [resolvable:$true] %s44
      %47 = dma.vmem_to_hbm [thread:$0]  %s45, 64, %s1, [#allocation4]
    $region13: #{tpu_custom_call.1} parent=1 // pred_fallthru
      _
    // Predicated region
    $region14: #{tpu_custom_call.1} parent=1 // pred_check
      _
    $region15: #{tpu_custom_call.1} parent=1 // pred_check_branch
      %49 = sbr.rel (0) target = $region17
    $region16: #{tpu_custom_call.1} parent=1 // pred_region
      %50 = dma.done [#allocation4], 64
    $region17: #{tpu_custom_call.1} parent=1 // pred_fallthru
      _
    %51 = vsyncpa [#allocation3], 1
    %52 = vsyncpa [#allocation4], 1

</llo_original>
